<compile_context>
chip_gen: v5e
topology: v5e:2x2
jax: 0.10.0
libtpu: 0.0.40
codegen_flags: <defaults>
</compile_context>

<pallas_src>
import jax
import jax.numpy as jnp
from jax.experimental import pallas as pl
from jax.experimental.pallas import tpu as pltpu

# ---- problem sizes (consistent with nn.Conv2d(3, 6, 3)) ----
N, C_IN, H, W = 2, 3, 16, 16
C_OUT, KH, KW = 6, 3, 3
OH, OW = H - KH + 1, W - KW + 1          # 14, 14  (stride=1, padding=0)
HW = H * W                               # 256
NHW = N * HW                             # 512 lanes (4 lane tiles)
K_DIM = KH * KW * C_IN                   # 27 (im2col contraction length)
K_PAD = 32                               # padded contraction (row 27 = ones for bias)
C_OUT_PAD = 8                            # sublane-tile-aligned output rows


def conv2d_kernel(x_ref, w_ref, o_ref):
    """Single invocation; everything resident in VMEM / vregs.

    x_ref: (C_IN, N*HW)        channels-major, batch folded into lanes
    w_ref: (C_OUT_PAD, K_PAD)  rows 0..5 = filters (kh,kw,c_in order),
                               column K_DIM holds the bias, rest zero
    o_ref: (C_OUT_PAD, N*HW)   padded output slab (rows >= C_OUT are zero)
    """
    x = x_ref[...]                                        # (3, 512)

    # ---- im2col in registers: 9 lane rolls + ones row + zero pad -> (32, 512)
    slabs = []
    for kh in range(KH):
        for kw in range(KW):
            s = kh * W + kw                               # flattened tap offset
            if s == 0:
                slabs.append(x)
            else:
                # rolled[:, c] = x[:, (c + s) mod NHW]; wraps only hit columns
                # that the wrapper slices off (spatial padding).
                slabs.append(pltpu.roll(x, shift=NHW - s, axis=1))
    patches = jnp.concatenate(
        slabs
        + [jnp.ones((1, NHW), jnp.float32),               # bias row
           jnp.zeros((K_PAD - K_DIM - 1, NHW), jnp.float32)],
        axis=0)                                           # (32, 512)

    # ---- one MXU push: (8, 32) @ (32, 512) -> (8, 512), bias already folded
    o_ref[...] = jax.lax.dot_general(
        w_ref[...], patches,
        dimension_numbers=(((1,), (0,)), ((), ())),
        preferred_element_type=jnp.float32,
    )


def conv2d_pallas(x_nchw, weight, bias):
    """x_nchw: (N, C_IN, H, W); weight: (C_OUT, C_IN, KH, KW); bias: (C_OUT,)."""
    # Channels-major, batch folded into the lane axis: (C_IN, N*HW).  6 KB array,
    # the transpose+reshape is effectively free on the wrapper side.
    x_cf = jnp.transpose(x_nchw, (1, 0, 2, 3)).reshape(C_IN, NHW)

    # Tiny filter repack: rows ordered (kh, kw, c_in); pad to (8, 32); bias in
    # column K_DIM so it is folded into the matmul via the ones row.
    w_taps = jnp.transpose(weight, (0, 2, 3, 1)).reshape(C_OUT, K_DIM)
    w_pad = jnp.zeros((C_OUT_PAD, K_PAD), jnp.float32)
    w_pad = w_pad.at[:C_OUT, :K_DIM].set(w_taps)
    w_pad = w_pad.at[:C_OUT, K_DIM].set(bias)

    out_pad = pl.pallas_call(
        conv2d_kernel,
        out_shape=jax.ShapeDtypeStruct((C_OUT_PAD, NHW), jnp.float32),
        in_specs=[
            pl.BlockSpec(memory_space=pltpu.MemorySpace.VMEM),
            pl.BlockSpec(memory_space=pltpu.MemorySpace.VMEM),
        ],
        out_specs=pl.BlockSpec(memory_space=pltpu.MemorySpace.VMEM),
    )(x_cf, w_pad)

    # Drop channel padding, restore NCHW, drop spatial padding (REQUIRED: the
    # padded columns contain roll-wraparound garbage by design).
    out_full = jnp.transpose(out_pad[:C_OUT].reshape(C_OUT, N, H, W),
                             (1, 0, 2, 3))
    return out_full[:, :, :OH, :OW]


def conv2d_reference(x_nchw, weight, bias):
    out = jax.lax.conv_general_dilated(
        x_nchw, weight, window_strides=(1, 1), padding="VALID",
        dimension_numbers=("NCHW", "OIHW", "NCHW"),
    )
    return out + bias.reshape(1, C_OUT, 1, 1)


if __name__ == "__main__":
    key = jax.random.PRNGKey(0)
    k_x, k_w, k_b = jax.random.split(key, 3)

    # Deterministic example inputs (shapes match nn.Conv2d(3, 6, 3)).
    x = jax.random.normal(k_x, (N, C_IN, H, W), dtype=jnp.float32)
    weight = jax.random.normal(k_w, (C_OUT, C_IN, KH, KW), dtype=jnp.float32) * 0.1
    bias = jax.random.normal(k_b, (C_OUT,), dtype=jnp.float32) * 0.1

    out = conv2d_pallas(x, weight, bias)
    out = jax.block_until_ready(out)

    ref = conv2d_reference(x, weight, bias)
    assert out.shape == (N, C_OUT, OH, OW), out.shape
    assert jnp.allclose(out, ref, atol=1e-4, rtol=1e-4), float(
        jnp.max(jnp.abs(out - ref)))

    print("KERNEL_OK")
</pallas_src>

<mosaic_0001>
module attributes {stable_mosaic.version = 11 : i64} {
  func.func @conv2d_kernel(%arg0: memref<3x512xf32, #tpu.memory_space<vmem>>, %arg1: memref<8x32xf32, #tpu.memory_space<vmem>>, %arg2: memref<8x512xf32, #tpu.memory_space<vmem>>) attributes {dimension_semantics = [], scalar_prefetch = 0 : i64, scratch_operands = 0 : i64, tpu.core_type = #tpu.core_type<tc>} {
    %c0 = arith.constant 0 : index
    %c0_0 = arith.constant 0 : index
    %0 = vector.load %arg0[%c0, %c0_0] : memref<3x512xf32, #tpu.memory_space<vmem>>, vector<3x512xf32>
    %c511_i32 = arith.constant 511 : i32
    %1 = tpu.dynamic_rotate %0 by %c511_i32 dim 1 : vector<3x512xf32>, i32 -> vector<3x512xf32>
    %c510_i32 = arith.constant 510 : i32
    %2 = tpu.dynamic_rotate %0 by %c510_i32 dim 1 : vector<3x512xf32>, i32 -> vector<3x512xf32>
    %c496_i32 = arith.constant 496 : i32
    %3 = tpu.dynamic_rotate %0 by %c496_i32 dim 1 : vector<3x512xf32>, i32 -> vector<3x512xf32>
    %c495_i32 = arith.constant 495 : i32
    %4 = tpu.dynamic_rotate %0 by %c495_i32 dim 1 : vector<3x512xf32>, i32 -> vector<3x512xf32>
    %c494_i32 = arith.constant 494 : i32
    %5 = tpu.dynamic_rotate %0 by %c494_i32 dim 1 : vector<3x512xf32>, i32 -> vector<3x512xf32>
    %c480_i32 = arith.constant 480 : i32
    %6 = tpu.dynamic_rotate %0 by %c480_i32 dim 1 : vector<3x512xf32>, i32 -> vector<3x512xf32>
    %c479_i32 = arith.constant 479 : i32
    %7 = tpu.dynamic_rotate %0 by %c479_i32 dim 1 : vector<3x512xf32>, i32 -> vector<3x512xf32>
    %c478_i32 = arith.constant 478 : i32
    %8 = tpu.dynamic_rotate %0 by %c478_i32 dim 1 : vector<3x512xf32>, i32 -> vector<3x512xf32>
    %cst = arith.constant 1.000000e+00 : f32
    %9 = vector.broadcast %cst : f32 to vector<1x512xf32>
    %cst_1 = arith.constant 0.000000e+00 : f32
    %10 = vector.broadcast %cst_1 : f32 to vector<4x512xf32>
    %11 = tpu.concatenate %0, %1, %2, %3, %4, %5, %6, %7, %8, %9, %10 in 0 : vector<3x512xf32>, vector<3x512xf32>, vector<3x512xf32>, vector<3x512xf32>, vector<3x512xf32>, vector<3x512xf32>, vector<3x512xf32>, vector<3x512xf32>, vector<3x512xf32>, vector<1x512xf32>, vector<4x512xf32> -> vector<32x512xf32>
    %c0_2 = arith.constant 0 : index
    %c0_3 = arith.constant 0 : index
    %12 = vector.load %arg1[%c0_2, %c0_3] : memref<8x32xf32, #tpu.memory_space<vmem>>, vector<8x32xf32>
    %cst_4 = arith.constant dense<0.000000e+00> : vector<8x512xf32>
    %13 = tpu.matmul %12, %11, %cst_4 {dimension_numbers = #tpu.dot_dimension_numbers<[1], [0], [0], [1], [0, 0, 1, 1], [], []>} : vector<8x32xf32>, vector<32x512xf32>, vector<8x512xf32> -> vector<8x512xf32>
    %c0_5 = arith.constant 0 : index
    %c0_6 = arith.constant 0 : index
    %14 = vector.load %arg2[%c0_5, %c0_6] : memref<8x512xf32, #tpu.memory_space<vmem>>, vector<8x512xf32>
    tpu.vector_store %arg2[%c0_5, %c0_6], %13 {strides = array<i32>} : memref<8x512xf32, #tpu.memory_space<vmem>>, vector<8x512xf32>,
    return
  }
}

</mosaic_0001>

<llo_original>
// kernel: tpu_custom_call.1
$region0: #{tpu_custom_call.1}
  #allocation0 [shape = 'u32[]', space=smem, size = 0x4, offset = 0x4, fixed_abs, tag = 'smem constant byte address 0x4 - core index']
  #allocation1 [shape = 'u32[72,128]{1,0:T(1,128)}', space=vmem, size = 0x9000, scoped, tag = 'internal scratch']
  %s0 = inlined_call_operand.hbm [shape: f32[3,512], index: 0, kind: input, shape index: {}]
  %s1 = inlined_call_operand.hbm [shape: f32[8,32], index: 1, kind: input, shape index: {}]
  %s2 = inlined_call_operand.hbm [shape: f32[8,512], index: 2, kind: output, shape index: {}]
  %s3 = sld [smem:[#allocation0]]
  $region26: #{tpu_custom_call.1} parent=0
    _
  %s5 = ssub.s32 1, %s3
  %s6 = scalar_select 0, %s5, %s3
  $region1: #{tpu_custom_call.1} parent=0
    #allocation2 [shape = 'u8[8192]{0}', space=vmem, size = 0x2000, scoped, tag = 'input window, operand 0, single buffered']
    #allocation3 [shape = 's32[1]{0}', space=sflag, size = 0x4, scoped, tag = 'scoped memory for tpu_custom_call.1']
    #allocation4 [shape = 's32[1]{0}', space=sflag, size = 0x4, scoped, tag = 'scoped memory for tpu_custom_call.1']
    #allocation5 [shape = 'u8[4096]{0}', space=vmem, size = 0x1000, scoped, tag = 'input window, operand 1, single buffered']
    #allocation6 [shape = 's32[1]{0}', space=sflag, size = 0x4, scoped, tag = 'scoped memory for tpu_custom_call.1']
    #allocation7 [shape = 'u8[16384]{0}', space=vmem, size = 0x4000, scoped, tag = 'output window, operand 0, single buffered']
    %7 = vsyncpa [#allocation3], 0
    %8 = vsyncpa [#allocation6], 0
    %9 = vsyncpa [#allocation4], 0
    // Predicated region
    $region2: #{tpu_custom_call.1} parent=1 // pred_check
      _
    $region3: #{tpu_custom_call.1} parent=1 // pred_check_branch
      %11 = sbr.rel (0) target = $region5
    $region4: #{tpu_custom_call.1} parent=1 // pred_region
      %13 = vsyncadd [#allocation3], 0
      %s15 = sshll.u32 %s0, 4
      %s16 = int_to_ptr.hbm [resolvable:$true] %s15
      %s17 = sshll.u32 [#allocation2], 4
      %s18 = int_to_ptr.vmem [resolvable:$true] %s17
      %20 = dma.hbm_to_vmem [thread:$0]  %s16, 256, %s18, [#allocation3]
    $region5: #{tpu_custom_call.1} parent=1 // pred_fallthru
      _
    // Predicated region
    $region6: #{tpu_custom_call.1} parent=1 // pred_check
      _
    $region7: #{tpu_custom_call.1} parent=1 // pred_check_branch
      %22 = sbr.rel (0) target = $region9
    $region8: #{tpu_custom_call.1} parent=1 // pred_region
      %24 = vsyncadd [#allocation6], 0
      %s26 = sshll.u32 %s1, 4
      %s27 = int_to_ptr.hbm [resolvable:$true] %s26
      %s28 = sshll.u32 [#allocation5], 4
      %s29 = int_to_ptr.vmem [resolvable:$true] %s28
      %31 = dma.hbm_to_vmem [thread:$0]  %s27, 128, %s29, [#allocation6]
    $region9: #{tpu_custom_call.1} parent=1 // pred_fallthru
      _
    // Predicated region
    $region10: #{tpu_custom_call.1} parent=1 // pred_check
      _
    $region11: #{tpu_custom_call.1} parent=1 // pred_check_branch
      %33 = sbr.rel (0) target = $region13
    $region12: #{tpu_custom_call.1} parent=1 // pred_region
      %35 = dma.done [#allocation3], 256
    $region13: #{tpu_custom_call.1} parent=1 // pred_fallthru
      _
    // Predicated region
    $region14: #{tpu_custom_call.1} parent=1 // pred_check
      _
    $region15: #{tpu_custom_call.1} parent=1 // pred_check_branch
      %37 = sbr.rel (0) target = $region17
    $region16: #{tpu_custom_call.1} parent=1 // pred_region
      %39 = dma.done [#allocation6], 128
    $region17: #{tpu_custom_call.1} parent=1 // pred_fallthru
      _
    %v40 = vld [vmem:[#allocation2] sm:$0x77]
    %v41 = vld [vmem:[#allocation2 + $0x8] sm:$0x77]
    %44 = vst [vmem:[#allocation1] ss:$2 sm:$0xff] %v40
    %s45 = scalar_lea.vmem [#allocation1], 16
    %46 = vst [vmem:[%s45] ss:$2 sm:$0xff] %v41
    %v47 = vld.sshfl [vmem:[#allocation1] sm:$0xff pattern:$0x75316420]
    %v48 = vld.sshfl [vmem:[#allocation1 + $0x8] sm:$0xff pattern:$0x75316420]
    %v49 = vld.sshfl [vmem:[#allocation1 + $0x10] sm:$0xff pattern:$0x75316420]
    %v50 = vld.sshfl [vmem:[#allocation1 + $0x18] sm:$0xff pattern:$0x75316420]
    %55 = vrot.lane.b32.xlu0 %v47, 127
    %v56 = vpop.permute.xlu0 %55
    %57 = vrot.lane.b32.xlu0 %v48, 127
    %v58 = vpop.permute.xlu0 %57
    %59 = vrot.lane.b32.xlu0 %v49, 127
    %v60 = vpop.permute.xlu0 %59
    %61 = vrot.lane.b32.xlu0 %v50, 127
    %v62 = vpop.permute.xlu0 %61
    %v63 = vlaneseq
    %v64 = vand.u32 %v63, 127
    %vm65 = vcmp.lt.s32.totalorder %v64, 127
    %v66 = vsel %vm65, %v60, %v62
    %v67 = vsel %vm65, %v58, %v60
    %v68 = vsel %vm65, %v56, %v58
    %v69 = vsel %vm65, %v62, %v56
    %70 = vst [vmem:[#allocation1] ss:$2 sm:$0xff] %v40
    %s71 = scalar_lea.vmem [#allocation1], 16
    %72 = vst [vmem:[%s71] ss:$2 sm:$0xff] %v41
    %v73 = vld.sshfl [vmem:[#allocation1] sm:$0xff pattern:$0x75316420]
    %v74 = vld.sshfl [vmem:[#allocation1 + $0x8] sm:$0xff pattern:$0x75316420]
    %v75 = vld.sshfl [vmem:[#allocation1 + $0x10] sm:$0xff pattern:$0x75316420]
    %v76 = vld.sshfl [vmem:[#allocation1 + $0x18] sm:$0xff pattern:$0x75316420]
    %81 = vrot.lane.b32.xlu0 %v73, 126
    %v82 = vpop.permute.xlu0 %81
    %83 = vrot.lane.b32.xlu0 %v74, 126
    %v84 = vpop.permute.xlu0 %83
    %85 = vrot.lane.b32.xlu0 %v75, 126
    %v86 = vpop.permute.xlu0 %85
    %87 = vrot.lane.b32.xlu0 %v76, 126
    %v88 = vpop.permute.xlu0 %87
    %vm89 = vcmp.lt.s32.totalorder %v64, 126
    %v90 = vsel %vm89, %v86, %v88
    %v91 = vsel %vm89, %v84, %v86
    %v92 = vsel %vm89, %v82, %v84
    %v93 = vsel %vm89, %v88, %v82
    %94 = vst [vmem:[#allocation1] ss:$2 sm:$0xff] %v40
    %s95 = scalar_lea.vmem [#allocation1], 16
    %96 = vst [vmem:[%s95] ss:$2 sm:$0xff] %v41
    %v97 = vld.sshfl [vmem:[#allocation1] sm:$0xff pattern:$0x75316420]
    %v98 = vld.sshfl [vmem:[#allocation1 + $0x8] sm:$0xff pattern:$0x75316420]
    %v99 = vld.sshfl [vmem:[#allocation1 + $0x10] sm:$0xff pattern:$0x75316420]
    %v100 = vld.sshfl [vmem:[#allocation1 + $0x18] sm:$0xff pattern:$0x75316420]
    %105 = vrot.lane.b32.xlu0 %v97, 112
    %v106 = vpop.permute.xlu0 %105
    %107 = vrot.lane.b32.xlu0 %v98, 112
    %v108 = vpop.permute.xlu0 %107
    %109 = vrot.lane.b32.xlu0 %v99, 112
    %v110 = vpop.permute.xlu0 %109
    %111 = vrot.lane.b32.xlu0 %v100, 112
    %v112 = vpop.permute.xlu0 %111
    %vm113 = vcmp.lt.s32.totalorder %v64, 112
    %v114 = vsel %vm113, %v110, %v112
    %v115 = vsel %vm113, %v108, %v110
    %v116 = vsel %vm113, %v106, %v108
    %v117 = vsel %vm113, %v112, %v106
    %118 = vst [vmem:[#allocation1] ss:$2 sm:$0xff] %v40
    %s119 = scalar_lea.vmem [#allocation1], 16
    %120 = vst [vmem:[%s119] ss:$2 sm:$0xff] %v41
    %v121 = vld.sshfl [vmem:[#allocation1] sm:$0xff pattern:$0x75316420]
    %v122 = vld.sshfl [vmem:[#allocation1 + $0x8] sm:$0xff pattern:$0x75316420]
    %v123 = vld.sshfl [vmem:[#allocation1 + $0x10] sm:$0xff pattern:$0x75316420]
    %v124 = vld.sshfl [vmem:[#allocation1 + $0x18] sm:$0xff pattern:$0x75316420]
    %129 = vrot.lane.b32.xlu0 %v121, 111
    %v130 = vpop.permute.xlu0 %129
    %131 = vrot.lane.b32.xlu0 %v122, 111
    %v132 = vpop.permute.xlu0 %131
    %133 = vrot.lane.b32.xlu0 %v123, 111
    %v134 = vpop.permute.xlu0 %133
    %135 = vrot.lane.b32.xlu0 %v124, 111
    %v136 = vpop.permute.xlu0 %135
    %vm137 = vcmp.lt.s32.totalorder %v64, 111
    %v138 = vsel %vm137, %v134, %v136
    %v139 = vsel %vm137, %v132, %v134
    %v140 = vsel %vm137, %v130, %v132
    %v141 = vsel %vm137, %v136, %v130
    %142 = vst [vmem:[#allocation1] ss:$2 sm:$0xff] %v40
    %s143 = scalar_lea.vmem [#allocation1], 16
    %144 = vst [vmem:[%s143] ss:$2 sm:$0xff] %v41
    %v145 = vld.sshfl [vmem:[#allocation1] sm:$0xff pattern:$0x75316420]
    %v146 = vld.sshfl [vmem:[#allocation1 + $0x8] sm:$0xff pattern:$0x75316420]
    %v147 = vld.sshfl [vmem:[#allocation1 + $0x10] sm:$0xff pattern:$0x75316420]
    %v148 = vld.sshfl [vmem:[#allocation1 + $0x18] sm:$0xff pattern:$0x75316420]
    %153 = vrot.lane.b32.xlu0 %v145, 110
    %v154 = vpop.permute.xlu0 %153
    %155 = vrot.lane.b32.xlu0 %v146, 110
    %v156 = vpop.permute.xlu0 %155
    %157 = vrot.lane.b32.xlu0 %v147, 110
    %v158 = vpop.permute.xlu0 %157
    %159 = vrot.lane.b32.xlu0 %v148, 110
    %v160 = vpop.permute.xlu0 %159
    %vm161 = vcmp.lt.s32.totalorder %v64, 110
    %v162 = vsel %vm161, %v158, %v160
    %v163 = vsel %vm161, %v156, %v158
    %v164 = vsel %vm161, %v154, %v156
    %v165 = vsel %vm161, %v160, %v154
    %166 = vst [vmem:[#allocation1] ss:$2 sm:$0xff] %v40
    %s167 = scalar_lea.vmem [#allocation1], 16
    %168 = vst [vmem:[%s167] ss:$2 sm:$0xff] %v41
    %v169 = vld.sshfl [vmem:[#allocation1] sm:$0xff pattern:$0x75316420]
    %v170 = vld.sshfl [vmem:[#allocation1 + $0x8] sm:$0xff pattern:$0x75316420]
    %v171 = vld.sshfl [vmem:[#allocation1 + $0x10] sm:$0xff pattern:$0x75316420]
    %v172 = vld.sshfl [vmem:[#allocation1 + $0x18] sm:$0xff pattern:$0x75316420]
    %177 = vrot.lane.b32.xlu0 %v169, 96
    %v178 = vpop.permute.xlu0 %177
    %179 = vrot.lane.b32.xlu0 %v170, 96
    %v180 = vpop.permute.xlu0 %179
    %181 = vrot.lane.b32.xlu0 %v171, 96
    %v182 = vpop.permute.xlu0 %181
    %183 = vrot.lane.b32.xlu0 %v172, 96
    %v184 = vpop.permute.xlu0 %183
    %vm185 = vcmp.lt.s32.totalorder %v64, 96
    %v186 = vsel %vm185, %v182, %v184
    %v187 = vsel %vm185, %v180, %v182
    %v188 = vsel %vm185, %v178, %v180
    %v189 = vsel %vm185, %v184, %v178
    %190 = vst [vmem:[#allocation1] ss:$2 sm:$0xff] %v40
    %s191 = scalar_lea.vmem [#allocation1], 16
    %192 = vst [vmem:[%s191] ss:$2 sm:$0xff] %v41
    %v193 = vld.sshfl [vmem:[#allocation1] sm:$0xff pattern:$0x75316420]
    %v194 = vld.sshfl [vmem:[#allocation1 + $0x8] sm:$0xff pattern:$0x75316420]
    %v195 = vld.sshfl [vmem:[#allocation1 + $0x10] sm:$0xff pattern:$0x75316420]
    %v196 = vld.sshfl [vmem:[#allocation1 + $0x18] sm:$0xff pattern:$0x75316420]
    %201 = vrot.lane.b32.xlu0 %v193, 95
    %v202 = vpop.permute.xlu0 %201
    %203 = vrot.lane.b32.xlu0 %v194, 95
    %v204 = vpop.permute.xlu0 %203
    %205 = vrot.lane.b32.xlu0 %v195, 95
    %v206 = vpop.permute.xlu0 %205
    %207 = vrot.lane.b32.xlu0 %v196, 95
    %v208 = vpop.permute.xlu0 %207
    %vm209 = vcmp.lt.s32.totalorder %v64, 95
    %v210 = vsel %vm209, %v206, %v208
    %v211 = vsel %vm209, %v204, %v206
    %v212 = vsel %vm209, %v202, %v204
    %v213 = vsel %vm209, %v208, %v202
    %214 = vst [vmem:[#allocation1] ss:$2 sm:$0xff] %v40
    %s215 = scalar_lea.vmem [#allocation1], 16
    %216 = vst [vmem:[%s215] ss:$2 sm:$0xff] %v41
    %v217 = vld.sshfl [vmem:[#allocation1] sm:$0xff pattern:$0x75316420]
    %v218 = vld.sshfl [vmem:[#allocation1 + $0x8] sm:$0xff pattern:$0x75316420]
    %v219 = vld.sshfl [vmem:[#allocation1 + $0x10] sm:$0xff pattern:$0x75316420]
    %v220 = vld.sshfl [vmem:[#allocation1 + $0x18] sm:$0xff pattern:$0x75316420]
    %225 = vrot.lane.b32.xlu0 %v217, 94
    %v226 = vpop.permute.xlu0 %225
    %227 = vrot.lane.b32.xlu0 %v218, 94
    %v228 = vpop.permute.xlu0 %227
    %229 = vrot.lane.b32.xlu0 %v219, 94
    %v230 = vpop.permute.xlu0 %229
    %231 = vrot.lane.b32.xlu0 %v220, 94
    %v232 = vpop.permute.xlu0 %231
    %vm233 = vcmp.lt.s32.totalorder %v64, 94
    %v234 = vsel %vm233, %v230, %v232
    %v235 = vsel %vm233, %v228, %v230
    %v236 = vsel %vm233, %v226, %v228
    %v237 = vsel %vm233, %v232, %v226
    %238 = vst [vmem:[#allocation1] ss:$2 sm:$0xff] %v40
    %s239 = scalar_lea.vmem [#allocation1], 16
    %240 = vst [vmem:[%s239] ss:$2 sm:$0xff] %v41
    %v241 = vld.sshfl [vmem:[#allocation1] sm:$0xff pattern:$0x75316420]
    %v242 = vld.sshfl [vmem:[#allocation1 + $0x8] sm:$0xff pattern:$0x75316420]
    %v243 = vld.sshfl [vmem:[#allocation1 + $0x10] sm:$0xff pattern:$0x75316420]
    %v244 = vld.sshfl [vmem:[#allocation1 + $0x18] sm:$0xff pattern:$0x75316420]
    %v253 = vrot.slane %v68, 5
    %v254 = vrot.slane %v67, 5
    %v255 = vrot.slane %v66, 5
    %v256 = vrot.slane %v69, 5
    %v265 = vrot.slane %v92, 2
    %v266 = vrot.slane %v91, 2
    %v267 = vrot.slane %v90, 2
    %v268 = vrot.slane %v93, 2
    %v277 = vrot.slane %v116, 7
    %v278 = vrot.slane %v115, 7
    %v279 = vrot.slane %v114, 7
    %v280 = vrot.slane %v117, 7
    %v289 = vrot.slane %v140, 4
    %v290 = vrot.slane %v139, 4
    %v291 = vrot.slane %v138, 4
    %v292 = vrot.slane %v141, 4
    %v301 = vrot.slane %v164, 1
    %v302 = vrot.slane %v163, 1
    %v303 = vrot.slane %v162, 1
    %v304 = vrot.slane %v165, 1
    %v313 = vrot.slane %v188, 6
    %v314 = vrot.slane %v187, 6
    %v315 = vrot.slane %v186, 6
    %v316 = vrot.slane %v189, 6
    %v325 = vrot.slane %v212, 3
    %v326 = vrot.slane %v211, 3
    %v327 = vrot.slane %v210, 3
    %v328 = vrot.slane %v213, 3
    %vm333 = vcmask 1042432
    %v334 = vsel %vm333, %v241, %v253
    %v335 = vsel %vm333, %v242, %v254
    %v336 = vsel %vm333, %v243, %v255
    %v337 = vsel %vm333, %v244, %v256
    %vm338 = vcmask 1045504
    %v339 = vsel %vm338, %v334, %v265
    %v340 = vsel %vm338, %v335, %v266
    %v341 = vsel %vm338, %v336, %v267
    %v342 = vsel %vm338, %v337, %v268
    %vm343 = vcmask 1040384
    %v344 = vsel %vm343, %v265, %v277
    %v345 = vsel %vm343, %v266, %v278
    %v346 = vsel %vm343, %v267, %v279
    %v347 = vsel %vm343, %v268, %v280
    %vm348 = vcmask 1043456
    %v349 = vsel %vm348, %v344, %v289
    %v350 = vsel %vm348, %v345, %v290
    %v351 = vsel %vm348, %v346, %v291
    %v352 = vsel %vm348, %v347, %v292
    %vm353 = vcmask 1046528
    %v354 = vsel %vm353, %v349, %v301
    %v355 = vsel %vm353, %v350, %v302
    %v356 = vsel %vm353, %v351, %v303
    %v357 = vsel %vm353, %v352, %v304
    %vm358 = vcmask 1041408
    %v359 = vsel %vm358, %v301, %v313
    %v360 = vsel %vm358, %v302, %v314
    %v361 = vsel %vm358, %v303, %v315
    %v362 = vsel %vm358, %v304, %v316
    %vm363 = vcmask 1044480
    %v364 = vsel %vm363, %v359, %v325
    %v365 = vsel %vm363, %v360, %v326
    %v366 = vsel %vm363, %v361, %v327
    %v367 = vsel %vm363, %v362, %v328
    %v368 = vsel %vm333, %v236, 1.0
    %v369 = vsel %vm333, %v235, 1.0
    %v370 = vsel %vm333, %v234, 1.0
    %v371 = vsel %vm333, %v237, 1.0
    %v372 = vsel %vm348, %v368, 0.0
    %v373 = vsel %vm348, %v369, 0.0
    %v374 = vsel %vm348, %v370, 0.0
    %v375 = vsel %vm348, %v371, 0.0
    %v376 = vld [vmem:[#allocation5] sm:$0xff]
    %vm377 = vcmask 261120
    %v379 = vsel %vm377, %v376, 0
    %381 = vmatpush.msra.mxu0 0.0
    %382 = vmatpush.msra.mxu0 0.0
    %383 = vmatpush.msra.mxu0 0.0
    %384 = vmatpush.msra.mxu0 0.0
    %385 = vmatpush.msra.mxu0 0.0
    %386 = vmatpush.msra.mxu0 0.0
    %387 = vmatpush.msra.mxu0 0.0
    %388 = vmatpush.msra.mxu0 0.0
    %389 = vmatpush.msra.mxu0 0.0
    %390 = vmatpush.msra.mxu0 0.0
    %391 = vmatpush.msra.mxu0 0.0
    %392 = vmatpush.msra.mxu0 0.0
    %393 = vmatpush.msra.mxu0 %v372
    %394 = vmatpush.msra.mxu0 %v364
    %395 = vmatpush.msra.mxu0 %v354
    %396 = vmatpush.msra.mxu0 %v339
    %397 = vmatmul.f32.gmra.mxu0 %v379
    %v398 = vpop.f32.mrf.mxu0
    %v399 = vadd.f32 0.0, %v398
    %400 = vdwg.mxu0
    %401 = vmatpush.msra.mxu0 0.0
    %402 = vmatpush.msra.mxu0 0.0
    %403 = vmatpush.msra.mxu0 0.0
    %404 = vmatpush.msra.mxu0 0.0
    %405 = vmatpush.msra.mxu0 0.0
    %406 = vmatpush.msra.mxu0 0.0
    %407 = vmatpush.msra.mxu0 0.0
    %408 = vmatpush.msra.mxu0 0.0
    %409 = vmatpush.msra.mxu0 0.0
    %410 = vmatpush.msra.mxu0 0.0
    %411 = vmatpush.msra.mxu0 0.0
    %412 = vmatpush.msra.mxu0 0.0
    %413 = vmatpush.msra.mxu0 %v373
    %414 = vmatpush.msra.mxu0 %v365
    %415 = vmatpush.msra.mxu0 %v355
    %416 = vmatpush.msra.mxu0 %v340
    %417 = vmatmul.f32.gmra.mxu0 %v379
    %v418 = vpop.f32.mrf.mxu0
    %v419 = vadd.f32 0.0, %v418
    %420 = vdwg.mxu0
    %421 = vmatpush.msra.mxu0 0.0
    %422 = vmatpush.msra.mxu0 0.0
    %423 = vmatpush.msra.mxu0 0.0
    %424 = vmatpush.msra.mxu0 0.0
    %425 = vmatpush.msra.mxu0 0.0
    %426 = vmatpush.msra.mxu0 0.0
    %427 = vmatpush.msra.mxu0 0.0
    %428 = vmatpush.msra.mxu0 0.0
    %429 = vmatpush.msra.mxu0 0.0
    %430 = vmatpush.msra.mxu0 0.0
    %431 = vmatpush.msra.mxu0 0.0
    %432 = vmatpush.msra.mxu0 0.0
    %433 = vmatpush.msra.mxu0 %v374
    %434 = vmatpush.msra.mxu0 %v366
    %435 = vmatpush.msra.mxu0 %v356
    %436 = vmatpush.msra.mxu0 %v341
    %437 = vmatmul.f32.gmra.mxu0 %v379
    %v438 = vpop.f32.mrf.mxu0
    %v439 = vadd.f32 0.0, %v438
    %440 = vdwg.mxu0
    %441 = vmatpush.msra.mxu0 0.0
    %442 = vmatpush.msra.mxu0 0.0
    %443 = vmatpush.msra.mxu0 0.0
    %444 = vmatpush.msra.mxu0 0.0
    %445 = vmatpush.msra.mxu0 0.0
    %446 = vmatpush.msra.mxu0 0.0
    %447 = vmatpush.msra.mxu0 0.0
    %448 = vmatpush.msra.mxu0 0.0
    %449 = vmatpush.msra.mxu0 0.0
    %450 = vmatpush.msra.mxu0 0.0
    %451 = vmatpush.msra.mxu0 0.0
    %452 = vmatpush.msra.mxu0 0.0
    %453 = vmatpush.msra.mxu0 %v375
    %454 = vmatpush.msra.mxu0 %v367
    %455 = vmatpush.msra.mxu0 %v357
    %456 = vmatpush.msra.mxu0 %v342
    %457 = vmatmul.f32.gmra.mxu0 %v379
    %v458 = vpop.f32.mrf.mxu0
    %v459 = vadd.f32 0.0, %v458
    %460 = vdwg.mxu0
    %461 = vst [vmem:[#allocation7] sm:$0xff] %v399
    %462 = vst [vmem:[#allocation7 + $0x8] sm:$0xff] %v419
    %463 = vst [vmem:[#allocation7 + $0x10] sm:$0xff] %v439
    %464 = vst [vmem:[#allocation7 + $0x18] sm:$0xff] %v459
    // Predicated region
    $region18: #{tpu_custom_call.1} parent=1 // pred_check
      _
    $region19: #{tpu_custom_call.1} parent=1 // pred_check_branch
      %466 = sbr.rel (0) target = $region21
    $region20: #{tpu_custom_call.1} parent=1 // pred_region
      %468 = vsyncadd [#allocation4], 0
      %s470 = sshll.u32 [#allocation7], 4
      %s471 = int_to_ptr.vmem [resolvable:$true] %s470
      %s472 = sshll.u32 %s2, 4
      %s473 = int_to_ptr.hbm [resolvable:$true] %s472
      %475 = dma.vmem_to_hbm [thread:$0]  %s471, 512, %s473, [#allocation4]
    $region21: #{tpu_custom_call.1} parent=1 // pred_fallthru
      _
    // Predicated region
    $region22: #{tpu_custom_call.1} parent=1 // pred_check
      _
    $region23: #{tpu_custom_call.1} parent=1 // pred_check_branch
      %477 = sbr.rel (0) target = $region25
    $region24: #{tpu_custom_call.1} parent=1 // pred_region
      %479 = dma.done [#allocation4], 512
    $region25: #{tpu_custom_call.1} parent=1 // pred_fallthru
      _
    %480 = vsyncpa [#allocation3], 1
    %481 = vsyncpa [#allocation6], 1
    %482 = vsyncpa [#allocation4], 1

</llo_original>
